<compile_context>
chip_gen: v7x
topology: tpu7x:2x2x1
jax: 0.10.0
libtpu: 0.0.40
codegen_flags: <defaults>
</compile_context>

<pallas_src>
import functools

import jax
import jax.numpy as jnp
from jax.experimental import pallas as pl
from jax.experimental.pallas import tpu as pltpu


def _round_up(x: int, m: int) -> int:
    return ((x + m - 1) // m) * m


def _choose_tiles(M: int, N: int, K: int):
    """MXU/lane-aligned tiles capped well inside every chip's VMEM.

    tm: multiple of 8 (sublanes); tn, tk: multiples of 128 (lane width; the 512 cap
    is also 256-aligned for the v6e/v7x 256x256 MXUs and 128-aligned for v5e).
    """
    tm = min(_round_up(M, 8), 512)
    tn = min(_round_up(N, 128), 512)
    tk = min(_round_up(K, 128), 512)
    return tm, tn, tk


# ---------------------------------------------------------------------------
# Kernels
# ---------------------------------------------------------------------------
def _matmul_full_k_kernel(x_ref, w_ref, o_ref):
    # Entire (padded) K extent is resident in VMEM: one MXU dot per output tile.
    o_ref[...] = jnp.dot(x_ref[...], w_ref[...], preferred_element_type=jnp.float32)


def _matmul_streamed_kernel(x_ref, w_ref, o_ref):
    k = pl.program_id(2)

    # Output block is resident across the K axis (its index_map ignores k):
    # accumulate directly into the fp32 output ref — no scratch, no final copy.
    @pl.when(k == 0)
    def _():
        o_ref[...] = jnp.zeros_like(o_ref)

    o_ref[...] += jnp.dot(x_ref[...], w_ref[...], preferred_element_type=jnp.float32)


# ---------------------------------------------------------------------------
# Wrapper
# ---------------------------------------------------------------------------
_FULL_K_VMEM_BUDGET = 12 * 1024 * 1024  # bytes, includes double-buffering factor


def synaptic_transmission(x, w, *, use_bf16=False, tm=None, tn=None, tk=None):
    """Compute x @ w on the MXU (the SynapticTransmission forward pass).

    x: [..., K], w: [K, N]. Returns [..., N] float32. Arbitrary (non-aligned)
    shapes are handled by zero-padding to the tile grid and slicing the result.
    """
    *lead, K = x.shape
    K2, N = w.shape
    assert K == K2, "input_size mismatch"
    M = 1
    for d in lead:
        M *= d
    x2 = x.reshape(M, K)

    _tm, _tn, _tk = _choose_tiles(M, N, K)
    tm = tm or _tm
    tn = tn or _tn
    tk = tk or _tk

    in_dtype = jnp.bfloat16 if use_bf16 else jnp.float32
    itemsize = jnp.dtype(in_dtype).itemsize

    Kp_full = _round_up(K, 128)
    # Footprint of the full-K path (x tile, w tile, out tile, all double-buffered).
    full_k_bytes = 2 * itemsize * (tm * Kp_full + Kp_full * tn) + 2 * 4 * tm * tn
    full_k = full_k_bytes <= _FULL_K_VMEM_BUDGET

    if full_k:
        Kp = Kp_full
    else:
        Kp = _round_up(K, tk)
    Mp, Np = _round_up(M, tm), _round_up(N, tn)

    xp = x2.astype(in_dtype)
    wp = w.astype(in_dtype)
    if (Mp, Kp) != (M, K):
        xp = jnp.pad(xp, ((0, Mp - M), (0, Kp - K)))
    if (Kp, Np) != (K, N):
        wp = jnp.pad(wp, ((0, Kp - K), (0, Np - N)))

    if full_k:
        # 2-D grid: x block stays resident while the N (inner) axis advances;
        # w block is re-fetched only when the N tile changes. Single dot, no K loop.
        grid = (Mp // tm, Np // tn)
        kernel = _matmul_full_k_kernel
        in_specs = [
            pl.BlockSpec((tm, Kp), lambda i, j: (i, 0)),
            pl.BlockSpec((Kp, tn), lambda i, j: (0, j)),
        ]
        out_spec = pl.BlockSpec((tm, tn), lambda i, j: (i, j))
        dim_sem = ("parallel", "parallel")
    else:
        # 3-D grid, K reduction innermost ("arbitrary"); accumulate in the output ref.
        grid = (Mp // tm, Np // tn, Kp // tk)
        kernel = _matmul_streamed_kernel
        in_specs = [
            pl.BlockSpec((tm, tk), lambda i, j, k: (i, k)),
            pl.BlockSpec((tk, tn), lambda i, j, k: (k, j)),
        ]
        out_spec = pl.BlockSpec((tm, tn), lambda i, j, k: (i, j))
        dim_sem = ("parallel", "parallel", "arbitrary")

    out_padded = pl.pallas_call(
        kernel,
        out_shape=jax.ShapeDtypeStruct((Mp, Np), jnp.float32),
        grid_spec=pltpu.PrefetchScalarGridSpec(
            num_scalar_prefetch=0,
            grid=grid,
            in_specs=in_specs,
            out_specs=out_spec,
        ),
        compiler_params=pltpu.CompilerParams(
            # M/N tiles independent (megacore-shardable on v7x's 2 TCs).
            dimension_semantics=dim_sem,
            # Tiles need <= ~14 MiB worst case; 32 MiB raises v5e's 16 MiB scoped
            # default and stays well inside v7x's 64 MiB physical VMEM.
            vmem_limit_bytes=32 * 1024 * 1024,
        ),
    )(xp, wp)

    out = out_padded[:M, :N]
    return out.reshape(*lead, N)


class SynapticTransmissionPallas:
    """JAX/Pallas port of the PyTorch SynapticTransmission module (forward only)."""

    def __init__(self, input_size, output_size, key):
        self.input_size = input_size
        self.output_size = output_size
        k_w, k_fc_w, k_fc_b = jax.random.split(key, 3)
        # synaptic_weights ~ torch.randn(input_size, output_size)
        self.synaptic_weights = jax.random.normal(
            k_w, (input_size, output_size), dtype=jnp.float32
        )
        # fc1 exists in the module but is unused in forward; init it for parity only.
        bound = 1.0 / (input_size ** 0.5)
        self.fc1_weight = jax.random.uniform(
            k_fc_w, (output_size, input_size), minval=-bound, maxval=bound
        )
        self.fc1_bias = jax.random.uniform(
            k_fc_b, (output_size,), minval=-bound, maxval=bound
        )

    def __call__(self, x):
        return synaptic_transmission(x, self.synaptic_weights)


if __name__ == "__main__":
    key = jax.random.PRNGKey(0)
    k_x, k_params, k_x2, k_w2, k_x3, k_w3 = jax.random.split(key, 6)

    # --- 1) Module-shaped small case (batch=8, input=32, output=32; N<128 padded) ---
    batch, input_size, output_size = 8, 32, 32
    x = jax.random.normal(k_x, (batch, input_size), dtype=jnp.float32)
    module = SynapticTransmissionPallas(input_size, output_size, k_params)

    out = jax.block_until_ready(module(x))
    ref = jnp.dot(x, module.synaptic_weights, precision=jax.lax.Precision.HIGHEST)
    assert out.shape == (batch, output_size)
    assert jnp.allclose(out, ref, atol=1e-4, rtol=1e-4), "mismatch vs reference (small)"

    # --- 2) Non-divisible shapes, full-K (resident) path ---
    M2, K2, N2 = 36, 300, 200
    x2 = jax.random.normal(k_x2, (M2, K2), dtype=jnp.float32)
    w2 = jax.random.normal(k_w2, (K2, N2), dtype=jnp.float32)
    out2 = jax.block_until_ready(synaptic_transmission(x2, w2))
    ref2 = jnp.dot(x2, w2, precision=jax.lax.Precision.HIGHEST)
    assert out2.shape == (M2, N2)
    assert jnp.allclose(out2, ref2, atol=1e-2, rtol=1e-3), "mismatch vs reference (padded)"

    # bf16-operand option (f32 accumulate): looser tolerance, higher MXU throughput.
    out2_bf16 = jax.block_until_ready(synaptic_transmission(x2, w2, use_bf16=True))
    assert jnp.allclose(out2_bf16, ref2, atol=1.0, rtol=5e-2), "mismatch vs reference (bf16)"

    # --- 3) Larger K so the streamed-K (3-D grid, accumulate-in-output) path runs ---
    M3, K3, N3 = 64, 4096, 512
    x3 = jax.random.normal(k_x3, (M3, K3), dtype=jnp.float32)
    w3 = jax.random.normal(k_w3, (K3, N3), dtype=jnp.float32)
    out3 = jax.block_until_ready(synaptic_transmission(x3, w3))
    ref3 = jnp.dot(x3, w3, precision=jax.lax.Precision.HIGHEST)
    assert out3.shape == (M3, N3)
    assert jnp.allclose(out3, ref3, atol=5e-2, rtol=1e-3), "mismatch vs reference (streamed K)"

    print("KERNEL_OK")
</pallas_src>

<mosaic_0001>
module attributes {stable_mosaic.version = 11 : i64} {
  func.func @_matmul_full_k_kernel(%arg0: i32, %arg1: i32, %arg2: memref<8x128xf32, #tpu.memory_space<vmem>>, %arg3: memref<128x128xf32, #tpu.memory_space<vmem>>, %arg4: memref<8x128xf32, #tpu.memory_space<vmem>>) attributes {dimension_semantics = [#tpu.dimension_semantics<parallel>, #tpu.dimension_semantics<parallel>], iteration_bounds = array<i64: 1, 1>, scalar_prefetch = 0 : i64, scratch_operands = 0 : i64, tpu.core_type = #tpu.core_type<tc>, window_params = [{transform_indices = @transform_0, window_bounds = array<i64: 8, 128>}, {transform_indices = @transform_1, window_bounds = array<i64: 128, 128>}, {transform_indices = @transform_2, window_bounds = array<i64: 8, 128>}]} {
    %c0 = arith.constant 0 : index
    %c0_0 = arith.constant 0 : index
    %0 = vector.load %arg2[%c0, %c0_0] : memref<8x128xf32, #tpu.memory_space<vmem>>, vector<8x128xf32>
    %c0_1 = arith.constant 0 : index
    %c0_2 = arith.constant 0 : index
    %1 = vector.load %arg3[%c0_1, %c0_2] : memref<128x128xf32, #tpu.memory_space<vmem>>, vector<128x128xf32>
    %cst = arith.constant dense<0.000000e+00> : vector<8x128xf32>
    %2 = tpu.matmul %0, %1, %cst {dimension_numbers = #tpu.dot_dimension_numbers<[1], [0], [0], [1], [0, 0, 1, 1], [], []>} : vector<8x128xf32>, vector<128x128xf32>, vector<8x128xf32> -> vector<8x128xf32>
    %c0_3 = arith.constant 0 : index
    %c0_4 = arith.constant 0 : index
    %3 = vector.load %arg4[%c0_3, %c0_4] : memref<8x128xf32, #tpu.memory_space<vmem>>, vector<8x128xf32>
    tpu.vector_store %arg4[%c0_3, %c0_4], %2 {strides = array<i32>} : memref<8x128xf32, #tpu.memory_space<vmem>>, vector<8x128xf32>,
    return
  }
  func.func @transform_0(%arg0: i32, %arg1: i32) -> (i32, i32) {
    %c0_i32 = arith.constant 0 : i32
    %c0_i32_0 = arith.constant 0 : i32
    return %arg0, %c0_i32 : i32, i32
  }
  func.func @transform_1(%arg0: i32, %arg1: i32) -> (i32, i32) {
    %c0_i32 = arith.constant 0 : i32
    %c0_i32_0 = arith.constant 0 : i32
    return %c0_i32, %arg1 : i32, i32
  }
  func.func @transform_2(%arg0: i32, %arg1: i32) -> (i32, i32) {
    %c0_i32 = arith.constant 0 : i32
    return %arg0, %arg1 : i32, i32
  }
}

</mosaic_0001>

<llo_original>
// kernel: tpu_custom_call.1
$region0: #{tpu_custom_call.1}
  #allocation0 [shape = 'u32[]', space=smem, size = 0x4, offset = 0x4, fixed_abs, tag = 'smem constant byte address 0x4 - core index']
  #allocation1 [shape = 'u32[144,128]{1,0:T(1,128)}', space=vmem, size = 0x12000, scoped, tag = 'internal scratch']
  %s0 = inlined_call_operand.hbm [shape: f32[8,128], index: 0, kind: input, shape index: {}]
  %s1 = inlined_call_operand.hbm [shape: f32[128,128], index: 1, kind: input, shape index: {}]
  %s2 = inlined_call_operand.hbm [shape: f32[8,128], index: 2, kind: output, shape index: {}]
  %s3 = sld [smem:[#allocation0]]
  $region26: #{tpu_custom_call.1} parent=0
    _
  %s5 = ssub.s32 1, %s3
  %s6 = scalar_select 0, %s5, %s3
  $region1: #{tpu_custom_call.1} parent=0
    #allocation2 [shape = 'u8[4096]{0}', space=vmem, size = 0x1000, scoped, tag = 'input window, operand 0, single buffered']
    #allocation3 [shape = 's32[1]{0}', space=sflag, size = 0x4, scoped, tag = 'scoped memory for tpu_custom_call.1']
    #allocation4 [shape = 's32[1]{0}', space=sflag, size = 0x4, scoped, tag = 'scoped memory for tpu_custom_call.1']
    #allocation5 [shape = 'u8[65536]{0}', space=vmem, size = 0x10000, scoped, tag = 'input window, operand 1, single buffered']
    #allocation6 [shape = 's32[1]{0}', space=sflag, size = 0x4, scoped, tag = 'scoped memory for tpu_custom_call.1']
    #allocation7 [shape = 'u8[4096]{0}', space=vmem, size = 0x1000, scoped, tag = 'output window, operand 0, single buffered']
    %7 = vsyncpa [#allocation3], 0
    %8 = vsyncpa [#allocation6], 0
    %9 = vsyncpa [#allocation4], 0
    // Predicated region
    $region2: #{tpu_custom_call.1} parent=1 // pred_check
      _
    $region3: #{tpu_custom_call.1} parent=1 // pred_check_branch
      %11 = sbr.rel (0) target = $region5
    $region4: #{tpu_custom_call.1} parent=1 // pred_region
      %s13 = ssub.s32 128, 128
      %14 = vsyncadd [#allocation3], %s13
      %s16 = sshll.u32 [#allocation2], 4
      %s17 = int_to_ptr.vmem [resolvable:$true] %s16
      %19 = dma.hbm_to_vmem [thread:$0]  %s0, 128, %s17, [#allocation3]
    $region5: #{tpu_custom_call.1} parent=1 // pred_fallthru
      _
    // Predicated region
    $region6: #{tpu_custom_call.1} parent=1 // pred_check
      _
    $region7: #{tpu_custom_call.1} parent=1 // pred_check_branch
      %21 = sbr.rel (0) target = $region9
    $region8: #{tpu_custom_call.1} parent=1 // pred_region
      %s23 = ssub.s32 2048, 2048
      %24 = vsyncadd [#allocation6], %s23
      %s25 = sshll.u32 [#allocation5], 4
      %s26 = int_to_ptr.vmem [resolvable:$true] %s25
      %31 = dma.hbm_to_vmem [thread:$0]  %s1, 2048, %s26, [#allocation6], 128, 128, 8
    $region9: #{tpu_custom_call.1} parent=1 // pred_fallthru
      _
    // Predicated region
    $region10: #{tpu_custom_call.1} parent=1 // pred_check
      _
    $region11: #{tpu_custom_call.1} parent=1 // pred_check_branch
      %33 = sbr.rel (0) target = $region13
    $region12: #{tpu_custom_call.1} parent=1 // pred_region
      %34 = dma.done [#allocation3], 128
    $region13: #{tpu_custom_call.1} parent=1 // pred_fallthru
      _
    // Predicated region
    $region14: #{tpu_custom_call.1} parent=1 // pred_check
      _
    $region15: #{tpu_custom_call.1} parent=1 // pred_check_branch
      %36 = sbr.rel (0) target = $region17
    $region16: #{tpu_custom_call.1} parent=1 // pred_region
      %37 = dma.done [#allocation6], 2048
    $region17: #{tpu_custom_call.1} parent=1 // pred_fallthru
      _
    %v38 = vld [vmem:[#allocation2] sm:$0xff]
    %v39 = vld [vmem:[#allocation5] sm:$0xff]
    %v40 = vld [vmem:[#allocation5 + $0x8] sm:$0xff]
    %v41 = vld [vmem:[#allocation5 + $0x10] sm:$0xff]
    %v42 = vld [vmem:[#allocation5 + $0x18] sm:$0xff]
    %v43 = vld [vmem:[#allocation5 + $0x20] sm:$0xff]
    %v44 = vld [vmem:[#allocation5 + $0x28] sm:$0xff]
    %v45 = vld [vmem:[#allocation5 + $0x30] sm:$0xff]
    %v46 = vld [vmem:[#allocation5 + $0x38] sm:$0xff]
    %v47 = vld [vmem:[#allocation5 + $0x40] sm:$0xff]
    %v48 = vld [vmem:[#allocation5 + $0x48] sm:$0xff]
    %v49 = vld [vmem:[#allocation5 + $0x50] sm:$0xff]
    %v50 = vld [vmem:[#allocation5 + $0x58] sm:$0xff]
    %v51 = vld [vmem:[#allocation5 + $0x60] sm:$0xff]
    %v52 = vld [vmem:[#allocation5 + $0x68] sm:$0xff]
    %v53 = vld [vmem:[#allocation5 + $0x70] sm:$0xff]
    %v54 = vld [vmem:[#allocation5 + $0x78] sm:$0xff]
    %55 = vmatprep.subr.mxu0 0.0
    %56 = vmatpush1.msra.mxu0 %v39
    %57 = vmatprep.subr.mxu0 0.0
    %58 = vmatpush1.msra.mxu0 %v40
    %59 = vmatprep.subr.mxu0 0.0
    %60 = vmatpush1.msra.mxu0 %v41
    %61 = vmatprep.subr.mxu0 0.0
    %62 = vmatpush1.msra.mxu0 %v42
    %63 = vmatprep.subr.mxu0 0.0
    %64 = vmatpush1.msra.mxu0 %v43
    %65 = vmatprep.subr.mxu0 0.0
    %66 = vmatpush1.msra.mxu0 %v44
    %67 = vmatprep.subr.mxu0 0.0
    %68 = vmatpush1.msra.mxu0 %v45
    %69 = vmatprep.subr.mxu0 0.0
    %70 = vmatpush1.msra.mxu0 %v46
    %71 = vmatprep.subr.mxu0 0.0
    %72 = vmatpush1.msra.mxu0 %v47
    %73 = vmatprep.subr.mxu0 0.0
    %74 = vmatpush1.msra.mxu0 %v48
    %75 = vmatprep.subr.mxu0 0.0
    %76 = vmatpush1.msra.mxu0 %v49
    %77 = vmatprep.subr.mxu0 0.0
    %78 = vmatpush1.msra.mxu0 %v50
    %79 = vmatprep.subr.mxu0 0.0
    %80 = vmatpush1.msra.mxu0 %v51
    %81 = vmatprep.subr.mxu0 0.0
    %82 = vmatpush1.msra.mxu0 %v52
    %83 = vmatprep.subr.mxu0 0.0
    %84 = vmatpush1.msra.mxu0 %v53
    %85 = vmatprep.subr.mxu0 0.0
    %86 = vmatpush1.msra.mxu0 %v54
    %87 = vmatprep.subr.mxu0 0.0
    %88 = vmatpush1.msra.mxu0 0.0
    %89 = vmatprep.subr.mxu0 0.0
    %90 = vmatpush1.msra.mxu0 0.0
    %91 = vmatprep.subr.mxu0 0.0
    %92 = vmatpush1.msra.mxu0 0.0
    %93 = vmatprep.subr.mxu0 0.0
    %94 = vmatpush1.msra.mxu0 0.0
    %95 = vmatprep.subr.mxu0 0.0
    %96 = vmatpush1.msra.mxu0 0.0
    %97 = vmatprep.subr.mxu0 0.0
    %98 = vmatpush1.msra.mxu0 0.0
    %99 = vmatprep.subr.mxu0 0.0
    %100 = vmatpush1.msra.mxu0 0.0
    %101 = vmatprep.subr.mxu0 0.0
    %102 = vmatpush1.msra.mxu0 0.0
    %103 = vmatprep.subr.mxu0 0.0
    %104 = vmatpush1.msra.mxu0 0.0
    %105 = vmatprep.subr.mxu0 0.0
    %106 = vmatpush1.msra.mxu0 0.0
    %107 = vmatprep.subr.mxu0 0.0
    %108 = vmatpush1.msra.mxu0 0.0
    %109 = vmatprep.subr.mxu0 0.0
    %110 = vmatpush1.msra.mxu0 0.0
    %111 = vmatprep.subr.mxu0 0.0
    %112 = vmatpush1.msra.mxu0 0.0
    %113 = vmatprep.subr.mxu0 0.0
    %114 = vmatpush1.msra.mxu0 0.0
    %115 = vmatprep.subr.mxu0 0.0
    %116 = vmatpush1.msra.mxu0 0.0
    %117 = vmatprep.subr.mxu0 0.0
    %118 = vmatpush1.msra.mxu0 0.0
    %119 = vmatprep.mubr.f32.mxu0 0.0
    %120 = vmatmul.mubr.f32.gmra.mrb[0].mxu0 %v38
    %v121 = vpop.f32.mrb[0].mxu0
    %v122 = vadd.f32 0.0, %v121
    %v123 = vpop.f32.mrb[0].mxu0
    %124 = vdwg.mxu0
    %125 = vst [vmem:[#allocation7] sm:$0xff] %v122
    // Predicated region
    $region18: #{tpu_custom_call.1} parent=1 // pred_check
      _
    $region19: #{tpu_custom_call.1} parent=1 // pred_check_branch
      %127 = sbr.rel (0) target = $region21
    $region20: #{tpu_custom_call.1} parent=1 // pred_region
      %s129 = ssub.s32 128, 128
      %130 = vsyncadd [#allocation4], %s129
      %s132 = sshll.u32 [#allocation7], 4
      %s133 = int_to_ptr.vmem [resolvable:$true] %s132
      %135 = dma.vmem_to_hbm [thread:$0]  %s133, 128, %s2, [#allocation4]
    $region21: #{tpu_custom_call.1} parent=1 // pred_fallthru
      _
    // Predicated region
    $region22: #{tpu_custom_call.1} parent=1 // pred_check
      _
    $region23: #{tpu_custom_call.1} parent=1 // pred_check_branch
      %137 = sbr.rel (0) target = $region25
    $region24: #{tpu_custom_call.1} parent=1 // pred_region
      %138 = dma.done [#allocation4], 128
    $region25: #{tpu_custom_call.1} parent=1 // pred_fallthru
      _
    %139 = vsyncpa [#allocation3], 1
    %140 = vsyncpa [#allocation6], 1
    %141 = vsyncpa [#allocation4], 1

</llo_original>
